<compile_context>
chip_gen: v7x
topology: tpu7x:2x2x1
jax: 0.10.0
libtpu: 0.0.40
codegen_flags: <defaults>
</compile_context>

<pallas_src>
import jax
import jax.numpy as jnp
from jax.experimental import pallas as pl
from jax.experimental.pallas import tpu as pltpu


HID_DIM = 64            # per-branch hidden width (self.hid_dim = 64 in PyTorch)
FUSED = 2 * HID_DIM     # fused actor+critic width = 128 (fills the lane dim)
BIAS_ROWS = 3 * 8       # each fused bias gets its own aligned 8-row slot


def _round_up(x, m):
    return (x + m - 1) // m * m


def _block_diag(a, b):
    ra, ca = a.shape
    rb, cb = b.shape
    top = jnp.concatenate([a, jnp.zeros((ra, cb), a.dtype)], axis=1)
    bot = jnp.concatenate([jnp.zeros((rb, ca), b.dtype), b], axis=1)
    return jnp.concatenate([top, bot], axis=0)


def actor_critic_kernel(state_ref, w_ref, b_ref, out_ref):
    """One batch tile: 3 fused bf16 matmuls compute both heads.

    w_ref (bf16) row layout (all rows are width-128):
      [0, D)               W1 = concat([aW1, cW1], axis=1)          (D, 128)
      [Dp, Dp+128)         W2 = blockdiag(aW2, cW2)                 (128, 128)
      [Dp+128, Dp+256)     W3 = blockdiag(aW3, cW3) zero-padded     (128, 128)
    b_ref (f32): rows 0 / 8 / 16 hold fused b1 / b2 / b3 (each (1, 128)).
    out_ref: (2, TB) lane-dense; row 0 = probability, row 1 = scores.
    """
    D = state_ref.shape[1]
    Dp = _round_up(D, 16)          # 16-row alignment keeps bf16 sublane packing clean
    H2 = FUSED                     # 128

    x = state_ref[...].astype(jnp.bfloat16)              # (TB, D)
    w1 = w_ref[0:D, :]                                   # (D, 128)   bf16
    w2 = w_ref[Dp:Dp + H2, :]                            # (128, 128) bf16
    w3 = w_ref[Dp + H2:Dp + 2 * H2, :]                   # (128, 128) bf16
    b1 = b_ref[0:1, :]                                   # (1, 128)   f32
    b2 = b_ref[8:9, :]
    b3 = b_ref[16:17, :]

    h1 = jnp.maximum(jnp.dot(x, w1, preferred_element_type=jnp.float32) + b1, 0.0)
    h2 = jnp.maximum(
        jnp.dot(h1.astype(jnp.bfloat16), w2, preferred_element_type=jnp.float32) + b2, 0.0)
    z3 = jnp.dot(h2.astype(jnp.bfloat16), w3, preferred_element_type=jnp.float32) + b3  # (TB, 128)

    # Lane-dense output: transpose the full (TB, 128) f32 tile (both dims are
    # native (8,128) multiples -> supported XLU transpose), keep rows 0:2 only,
    # then tanh on just the 2*TB useful elements.
    zt = jnp.transpose(z3)                               # (128, TB)
    out_ref[...] = jnp.tanh(zt[0:2, :])                  # (2, TB)


def _choose_tiling(B, tb_cap):
    """Pick (TB, B_pad, num_tiles) with TB a multiple of 128 and TB <= tb_cap.

    Minimizes padded batch; on a tie prefers an even tile count so the two v7x
    TensorCores get a balanced split under dimension_semantics=("parallel",).
    """
    b128 = _round_up(max(B, 1), 128)

    def plan(n):
        tbn = _round_up(pl.cdiv(b128, n), 128)
        return (tbn, tbn * n, n)

    n0 = pl.cdiv(b128, tb_cap)
    candidates = [plan(n0)]
    if n0 % 2 == 1 and b128 >= 256:
        candidates.append(plan(n0 + 1))
    candidates.sort(key=lambda t: (t[1], t[2] % 2))
    return candidates[0]


def actor_critic_forward(state, w_pack, b_pack, *, tb=2048):
    """state: (B, input_dim) f32.  w_pack/b_pack: from pack_params."""
    B, D = state.shape
    Dp = _round_up(D, 16)
    # Guard against a pack built for a different input_dim (silent misread otherwise).
    assert w_pack.shape == (Dp + 2 * FUSED, FUSED), "weight pack does not match input_dim"
    assert b_pack.shape == (BIAS_ROWS, FUSED), "bias pack has unexpected shape"
    assert tb % 128 == 0, "tb must be a multiple of 128 (lane-dense transposed output)"

    TB, B_pad, num_tiles = _choose_tiling(B, tb)
    if B_pad != B:
        state = jnp.pad(state, ((0, B_pad - B), (0, 0)))

    out = pl.pallas_call(
        actor_critic_kernel,
        out_shape=jax.ShapeDtypeStruct((2, B_pad), jnp.float32),
        grid=(num_tiles,),
        in_specs=[
            pl.BlockSpec((TB, D), lambda i: (i, 0)),          # batch-tiled state
            pl.BlockSpec(w_pack.shape, lambda i: (0, 0)),     # weights: DMA'd once, VMEM-resident
            pl.BlockSpec(b_pack.shape, lambda i: (0, 0)),     # f32 biases: DMA'd once
        ],
        out_specs=pl.BlockSpec((2, TB), lambda i: (0, i)),    # lane-dense (2, TB) tiles
        compiler_params=pltpu.CompilerParams(
            dimension_semantics=("parallel",),                # shard batch tiles across TCs (v7x)
        ),
    )(state, w_pack, b_pack)

    probability = out[0, :B][:, None]   # (B, 1)
    scores = out[1, :B][:, None]        # (B, 1)
    return probability, scores


def init_params(key, input_dim, hid_dim=HID_DIM):
    """Deterministic synthetic parameters (PyTorch Linear shapes, transposed)."""
    keys = jax.random.split(key, 12)

    def lin(kw, kb, fan_in, fan_out):
        bound = 1.0 / jnp.sqrt(jnp.float32(fan_in))
        w = jax.random.uniform(kw, (fan_in, fan_out), jnp.float32, -bound, bound)
        b = jax.random.uniform(kb, (1, fan_out), jnp.float32, -bound, bound)
        return w, b

    aw1, ab1 = lin(keys[0], keys[1], input_dim, hid_dim)
    aw2, ab2 = lin(keys[2], keys[3], hid_dim, hid_dim)
    aw3, ab3 = lin(keys[4], keys[5], hid_dim, 1)
    cw1, cb1 = lin(keys[6], keys[7], input_dim, hid_dim)
    cw2, cb2 = lin(keys[8], keys[9], hid_dim, hid_dim)
    cw3, cb3 = lin(keys[10], keys[11], hid_dim, 1)
    return dict(
        aw1=aw1, ab1=ab1, aw2=aw2, ab2=ab2, aw3=aw3, ab3=ab3,
        cw1=cw1, cb1=cb1, cw2=cw2, cb2=cb2, cw3=cw3, cb3=cb3,
    )


def pack_params(p, input_dim, hid_dim=HID_DIM, matmul_dtype=jnp.bfloat16):
    """Host-side fusion: bf16 weight pack (Dp+256, 128) + f32 bias pack (24, 128)."""
    D = input_dim
    H2 = 2 * hid_dim
    Dp = _round_up(D, 16)

    w1 = jnp.concatenate([p["aw1"], p["cw1"]], axis=1)                    # (D, 128)
    w2 = _block_diag(p["aw2"], p["cw2"])                                  # (128, 128)
    w3 = jnp.pad(_block_diag(p["aw3"], p["cw3"]), ((0, 0), (0, H2 - 2)))  # (128, 128)
    w_pack = jnp.concatenate(
        [jnp.pad(w1, ((0, Dp - D), (0, 0))), w2, w3], axis=0).astype(matmul_dtype)

    b1 = jnp.concatenate([p["ab1"], p["cb1"]], axis=1)                    # (1, 128)
    b2 = jnp.concatenate([p["ab2"], p["cb2"]], axis=1)                    # (1, 128)
    b3 = jnp.pad(jnp.concatenate([p["ab3"], p["cb3"]], axis=1),
                 ((0, 0), (0, H2 - 2)))                                   # (1, 128)
    b_pack = jnp.concatenate(
        [jnp.pad(b1, ((0, 7), (0, 0))),
         jnp.pad(b2, ((0, 7), (0, 0))),
         jnp.pad(b3, ((0, 7), (0, 0)))], axis=0).astype(jnp.float32)      # (24, 128)
    return w_pack, b_pack


def actor_critic_ref(state, p):
    """Pure-JAX f32 reference of the original (unfused) module forward."""
    a = jnp.maximum(state @ p["aw1"] + p["ab1"], 0.0)
    a = jnp.maximum(a @ p["aw2"] + p["ab2"], 0.0)
    prob = jnp.tanh(a @ p["aw3"] + p["ab3"])
    c = jnp.maximum(state @ p["cw1"] + p["cb1"], 0.0)
    c = jnp.maximum(c @ p["cw2"] + p["cb2"], 0.0)
    score = jnp.tanh(c @ p["cw3"] + p["cb3"])
    return prob, score


# TODO(synk): record_episode / clear_memory / calc_R / calc_loss are host-side
# Python-list bookkeeping and Categorical-distribution training utilities, not
# part of forward(); they have no Pallas equivalent and are left out.

if __name__ == "__main__":
    key = jax.random.PRNGKey(0)
    k_state, k_params, k_big = jax.random.split(key, 3)

    # input_dims = (32,), small synthetic batch
    batch, input_dim = 8, 32
    state = jax.random.normal(k_state, (batch, input_dim), jnp.float32)
    params = init_params(k_params, input_dim)
    w_pack, b_pack = pack_params(params, input_dim)

    prob, score = actor_critic_forward(state, w_pack, b_pack)
    prob = jax.block_until_ready(prob)
    score = jax.block_until_ready(score)

    prob_ref, score_ref = actor_critic_ref(state, params)
    assert prob.shape == (batch, 1) and score.shape == (batch, 1)
    # bf16 matmul operands (f32 accumulate) -> loosened parity tolerance.
    assert jnp.allclose(prob, prob_ref, atol=2e-2, rtol=2e-2)
    assert jnp.allclose(score, score_ref, atol=2e-2, rtol=2e-2)

    # Exercise the multi-tile / padded-tail path (tb=512 -> TB=384, grid=3, B_pad=1152).
    big_batch = 1040
    big_state = jax.random.normal(k_big, (big_batch, input_dim), jnp.float32)
    bprob, bscore = actor_critic_forward(big_state, w_pack, b_pack, tb=512)
    bprob = jax.block_until_ready(bprob)
    bscore = jax.block_until_ready(bscore)

    bprob_ref, bscore_ref = actor_critic_ref(big_state, params)
    assert bprob.shape == (big_batch, 1) and bscore.shape == (big_batch, 1)
    assert jnp.allclose(bprob, bprob_ref, atol=2e-2, rtol=2e-2)
    assert jnp.allclose(bscore, bscore_ref, atol=2e-2, rtol=2e-2)

    print("KERNEL_OK")
</pallas_src>

<mosaic_0001>
module attributes {stable_mosaic.version = 11 : i64} {
  func.func @actor_critic_kernel(%arg0: i32, %arg1: memref<128x32xf32, #tpu.memory_space<vmem>>, %arg2: memref<288x128xbf16, #tpu.memory_space<vmem>>, %arg3: memref<24x128xf32, #tpu.memory_space<vmem>>, %arg4: memref<2x128xf32, #tpu.memory_space<vmem>>) attributes {dimension_semantics = [#tpu.dimension_semantics<parallel>], iteration_bounds = array<i64: 1>, scalar_prefetch = 0 : i64, scratch_operands = 0 : i64, tpu.core_type = #tpu.core_type<tc>, window_params = [{transform_indices = @transform_0, window_bounds = array<i64: 128, 32>}, {pipeline_mode = #tpu.pipeline_mode<synchronous>, transform_indices = @transform_1, window_bounds = array<i64: 288, 128>}, {pipeline_mode = #tpu.pipeline_mode<synchronous>, transform_indices = @transform_2, window_bounds = array<i64: 24, 128>}, {transform_indices = @transform_3, window_bounds = array<i64: 2, 128>}]} {
    %c0 = arith.constant 0 : index
    %c0_0 = arith.constant 0 : index
    %0 = vector.load %arg1[%c0, %c0_0] : memref<128x32xf32, #tpu.memory_space<vmem>>, vector<128x32xf32>
    %1 = arith.truncf %0 : vector<128x32xf32> to vector<128x32xbf16>
    %c0_1 = arith.constant 0 : index
    %c0_2 = arith.constant 0 : index
    %2 = vector.load %arg2[%c0_1, %c0_2] : memref<288x128xbf16, #tpu.memory_space<vmem>>, vector<32x128xbf16>
    %c32 = arith.constant 32 : index
    %c0_3 = arith.constant 0 : index
    %3 = vector.load %arg2[%c32, %c0_3] : memref<288x128xbf16, #tpu.memory_space<vmem>>, vector<128x128xbf16>
    %c160 = arith.constant 160 : index
    %c0_4 = arith.constant 0 : index
    %4 = vector.load %arg2[%c160, %c0_4] : memref<288x128xbf16, #tpu.memory_space<vmem>>, vector<128x128xbf16>
    %c0_5 = arith.constant 0 : index
    %c0_6 = arith.constant 0 : index
    %5 = vector.load %arg3[%c0_5, %c0_6] : memref<24x128xf32, #tpu.memory_space<vmem>>, vector<1x128xf32>
    %c8 = arith.constant 8 : index
    %c0_7 = arith.constant 0 : index
    %6 = vector.load %arg3[%c8, %c0_7] : memref<24x128xf32, #tpu.memory_space<vmem>>, vector<1x128xf32>
    %c16 = arith.constant 16 : index
    %c0_8 = arith.constant 0 : index
    %7 = vector.load %arg3[%c16, %c0_8] : memref<24x128xf32, #tpu.memory_space<vmem>>, vector<1x128xf32>
    %cst = arith.constant dense<0.000000e+00> : vector<128x128xf32>
    %8 = tpu.matmul %1, %2, %cst {dimension_numbers = #tpu.dot_dimension_numbers<[1], [0], [0], [1], [0, 0, 1, 1], [], []>} : vector<128x32xbf16>, vector<32x128xbf16>, vector<128x128xf32> -> vector<128x128xf32>
    %9 = vector.broadcast %5 : vector<1x128xf32> to vector<128x128xf32>
    %10 = arith.addf %8, %9 : vector<128x128xf32>
    %cst_9 = arith.constant 0.000000e+00 : f32
    %11 = vector.broadcast %cst_9 : f32 to vector<128x128xf32>
    %12 = arith.maximumf %10, %11 : vector<128x128xf32>
    %13 = arith.truncf %12 : vector<128x128xf32> to vector<128x128xbf16>
    %cst_10 = arith.constant dense<0.000000e+00> : vector<128x128xf32>
    %14 = tpu.matmul %13, %3, %cst_10 {dimension_numbers = #tpu.dot_dimension_numbers<[1], [0], [0], [1], [0, 0, 1, 1], [], []>} : vector<128x128xbf16>, vector<128x128xbf16>, vector<128x128xf32> -> vector<128x128xf32>
    %15 = vector.broadcast %6 : vector<1x128xf32> to vector<128x128xf32>
    %16 = arith.addf %14, %15 : vector<128x128xf32>
    %cst_11 = arith.constant 0.000000e+00 : f32
    %17 = vector.broadcast %cst_11 : f32 to vector<128x128xf32>
    %18 = arith.maximumf %16, %17 : vector<128x128xf32>
    %19 = arith.truncf %18 : vector<128x128xf32> to vector<128x128xbf16>
    %cst_12 = arith.constant dense<0.000000e+00> : vector<128x128xf32>
    %20 = tpu.matmul %19, %4, %cst_12 {dimension_numbers = #tpu.dot_dimension_numbers<[1], [0], [0], [1], [0, 0, 1, 1], [], []>} : vector<128x128xbf16>, vector<128x128xbf16>, vector<128x128xf32> -> vector<128x128xf32>
    %21 = vector.broadcast %7 : vector<1x128xf32> to vector<128x128xf32>
    %22 = arith.addf %20, %21 : vector<128x128xf32>
    %23 = tpu.transpose %22, [1, 0] : vector<128x128xf32> -> vector<128x128xf32>
    %24 = vector.extract_strided_slice %23 {offsets = [0, 0], sizes = [2, 128], strides = [1, 1]} : vector<128x128xf32> to vector<2x128xf32>
    %25 = math.tanh %24 : vector<2x128xf32>
    %c0_13 = arith.constant 0 : index
    %c0_14 = arith.constant 0 : index
    %26 = vector.load %arg4[%c0_13, %c0_14] : memref<2x128xf32, #tpu.memory_space<vmem>>, vector<2x128xf32>
    tpu.vector_store %arg4[%c0_13, %c0_14], %25 {strides = array<i32>} : memref<2x128xf32, #tpu.memory_space<vmem>>, vector<2x128xf32>,
    return
  }
  func.func @transform_0(%arg0: i32) -> (i32, i32) {
    %c0_i32 = arith.constant 0 : i32
    %c0_i32_0 = arith.constant 0 : i32
    return %arg0, %c0_i32 : i32, i32
  }
  func.func @transform_1(%arg0: i32) -> (i32, i32) {
    %c0_i32 = arith.constant 0 : i32
    %c0_i32_0 = arith.constant 0 : i32
    %c0_i32_1 = arith.constant 0 : i32
    return %c0_i32, %c0_i32_0 : i32, i32
  }
  func.func @transform_2(%arg0: i32) -> (i32, i32) {
    %c0_i32 = arith.constant 0 : i32
    %c0_i32_0 = arith.constant 0 : i32
    %c0_i32_1 = arith.constant 0 : i32
    return %c0_i32, %c0_i32_0 : i32, i32
  }
  func.func @transform_3(%arg0: i32) -> (i32, i32) {
    %c0_i32 = arith.constant 0 : i32
    %c0_i32_0 = arith.constant 0 : i32
    return %c0_i32, %arg0 : i32, i32
  }
}

</mosaic_0001>

<llo_original>
// kernel: tpu_custom_call.1
$region0: #{tpu_custom_call.1}
  #allocation0 [shape = 'u32[]', space=smem, size = 0x4, offset = 0x4, fixed_abs, tag = 'smem constant byte address 0x4 - core index']
  #allocation1 [shape = 'u32[144,128]{1,0:T(1,128)}', space=vmem, size = 0x12000, scoped, tag = 'internal scratch']
  %s0 = inlined_call_operand.vmem [shape: f32[128,32], index: 0, kind: input, shape index: {}]
  %s1 = inlined_call_operand.vmem [shape: bf16[288,128], index: 1, kind: input, shape index: {}]
  %s2 = inlined_call_operand.hbm [shape: f32[24,128], index: 2, kind: input, shape index: {}]
  %s3 = inlined_call_operand.hbm [shape: f32[2,128], index: 3, kind: output, shape index: {}]
  %s4 = sld [smem:[#allocation0]]
  $region26: #{tpu_custom_call.1} parent=0
    _
  %s6 = ssub.s32 1, %s4
  %s7 = scalar_select 0, %s6, %s4
  $region1: #{tpu_custom_call.1} parent=0
    #allocation2 [shape = 'u8[12288]{0}', space=vmem, size = 0x3000, scoped, tag = 'input window, operand 2, single buffered']
    #allocation3 [shape = 's32[1]{0}', space=sflag, size = 0x4, scoped, tag = 'scoped memory for tpu_custom_call.1']
    #allocation4 [shape = 's32[1]{0}', space=sflag, size = 0x4, scoped, tag = 'scoped memory for tpu_custom_call.1']
    #allocation5 [shape = 'u8[1024]{0}', space=vmem, size = 0x400, scoped, tag = 'output window, operand 0, single buffered']
    %8 = vsyncpa [#allocation3], 0
    %9 = vsyncpa [#allocation4], 0
    // Predicated region
    $region2: #{tpu_custom_call.1} parent=1 // pred_check
      _
    $region3: #{tpu_custom_call.1} parent=1 // pred_check_branch
      %11 = sbr.rel (0) target = $region5
    $region4: #{tpu_custom_call.1} parent=1 // pred_region
      _
    $region5: #{tpu_custom_call.1} parent=1 // pred_fallthru
      _
    // Predicated region
    $region6: #{tpu_custom_call.1} parent=1 // pred_check
      _
    $region7: #{tpu_custom_call.1} parent=1 // pred_check_branch
      %13 = sbr.rel (0) target = $region9
    $region8: #{tpu_custom_call.1} parent=1 // pred_region
      _
    $region9: #{tpu_custom_call.1} parent=1 // pred_fallthru
      _
    // Predicated region
    $region10: #{tpu_custom_call.1} parent=1 // pred_check
      _
    $region11: #{tpu_custom_call.1} parent=1 // pred_check_branch
      %15 = sbr.rel (0) target = $region13
    $region12: #{tpu_custom_call.1} parent=1 // pred_region
      %s17 = ssub.s32 384, 384
      %18 = vsyncadd [#allocation3], %s17
      %s19 = sshll.u32 [#allocation2], 4
      %s20 = int_to_ptr.vmem [resolvable:$true] %s19
      %25 = dma.hbm_to_vmem [thread:$0]  %s2, 384, %s20, [#allocation3], 128, 128, 8
    $region13: #{tpu_custom_call.1} parent=1 // pred_fallthru
      _
    // Predicated region
    $region14: #{tpu_custom_call.1} parent=1 // pred_check
      _
    $region15: #{tpu_custom_call.1} parent=1 // pred_check_branch
      %27 = sbr.rel (0) target = $region17
    $region16: #{tpu_custom_call.1} parent=1 // pred_region
      %28 = dma.done [#allocation3], 384
    $region17: #{tpu_custom_call.1} parent=1 // pred_fallthru
      _
    %v30 = vld [vmem:[%s0] sm:$0xff]
    %v31 = vld [vmem:[%s0 + $0x8] sm:$0xff]
    %v32 = vld [vmem:[%s0 + $0x10] sm:$0xff]
    %v33 = vld [vmem:[%s0 + $0x18] sm:$0xff]
    %v34 = vld [vmem:[%s0 + $0x20] sm:$0xff]
    %v35 = vld [vmem:[%s0 + $0x28] sm:$0xff]
    %v36 = vld [vmem:[%s0 + $0x30] sm:$0xff]
    %v37 = vld [vmem:[%s0 + $0x38] sm:$0xff]
    %v38 = vld [vmem:[%s0 + $0x40] sm:$0xff]
    %v39 = vld [vmem:[%s0 + $0x48] sm:$0xff]
    %v40 = vld [vmem:[%s0 + $0x50] sm:$0xff]
    %v41 = vld [vmem:[%s0 + $0x58] sm:$0xff]
    %v42 = vld [vmem:[%s0 + $0x60] sm:$0xff]
    %v43 = vld [vmem:[%s0 + $0x68] sm:$0xff]
    %v44 = vld [vmem:[%s0 + $0x70] sm:$0xff]
    %v45 = vld [vmem:[%s0 + $0x78] sm:$0xff]
    %v46 = vpack.c.bf16 %v31, %v30
    %v47 = vpack.c.bf16 %v33, %v32
    %v48 = vpack.c.bf16 %v35, %v34
    %v49 = vpack.c.bf16 %v37, %v36
    %v50 = vpack.c.bf16 %v39, %v38
    %v51 = vpack.c.bf16 %v41, %v40
    %v52 = vpack.c.bf16 %v43, %v42
    %v53 = vpack.c.bf16 %v45, %v44
    %v54 = vld [vmem:[%s1] sm:$0xf]
    %v55 = vld [vmem:[%s1 + $0x4] sm:$0xf]
    %v56 = vld [vmem:[%s1 + $0x8] sm:$0xf]
    %v57 = vld [vmem:[%s1 + $0xc] sm:$0xf]
    %v58 = vld [vmem:[%s1 + $0x10] sm:$0xf]
    %v59 = vld [vmem:[%s1 + $0x14] sm:$0xf]
    %v60 = vld [vmem:[%s1 + $0x18] sm:$0xf]
    %v61 = vld [vmem:[%s1 + $0x1c] sm:$0xf]
    %v62 = vld [vmem:[%s1 + $0x20] sm:$0xf]
    %v63 = vld [vmem:[%s1 + $0x24] sm:$0xf]
    %v64 = vld [vmem:[%s1 + $0x28] sm:$0xf]
    %v65 = vld [vmem:[%s1 + $0x2c] sm:$0xf]
    %v66 = vld [vmem:[%s1 + $0x30] sm:$0xf]
    %v67 = vld [vmem:[%s1 + $0x34] sm:$0xf]
    %v68 = vld [vmem:[%s1 + $0x38] sm:$0xf]
    %v69 = vld [vmem:[%s1 + $0x3c] sm:$0xf]
    %v70 = vld [vmem:[%s1 + $0x40] sm:$0xf]
    %v71 = vld [vmem:[%s1 + $0x44] sm:$0xf]
    %v72 = vld [vmem:[%s1 + $0x48] sm:$0xf]
    %v73 = vld [vmem:[%s1 + $0x4c] sm:$0xf]
    %v74 = vld [vmem:[%s1 + $0x50] sm:$0xf]
    %v75 = vld [vmem:[%s1 + $0x54] sm:$0xf]
    %v76 = vld [vmem:[%s1 + $0x58] sm:$0xf]
    %v77 = vld [vmem:[%s1 + $0x5c] sm:$0xf]
    %v78 = vld [vmem:[%s1 + $0x60] sm:$0xf]
    %v79 = vld [vmem:[%s1 + $0x64] sm:$0xf]
    %v80 = vld [vmem:[%s1 + $0x68] sm:$0xf]
    %v81 = vld [vmem:[%s1 + $0x6c] sm:$0xf]
    %v82 = vld [vmem:[%s1 + $0x70] sm:$0xf]
    %v83 = vld [vmem:[%s1 + $0x74] sm:$0xf]
    %v84 = vld [vmem:[%s1 + $0x78] sm:$0xf]
    %v85 = vld [vmem:[%s1 + $0x7c] sm:$0xf]
    %v86 = vld [vmem:[%s1 + $0x80] sm:$0xf]
    %v87 = vld [vmem:[%s1 + $0x84] sm:$0xf]
    %v88 = vld [vmem:[%s1 + $0x88] sm:$0xf]
    %v89 = vld [vmem:[%s1 + $0x8c] sm:$0xf]
    %v90 = vld [vmem:[#allocation2] sm:$0x1]
    %v91 = vld [vmem:[#allocation2 + $0x8] sm:$0x1]
    %v92 = vld [vmem:[#allocation2 + $0x10] sm:$0x1]
    %v93 = vlaneseq
    %v94 = vshrl.u32 %v93, 7
    %v95 = vsub.s32 0, %v94
    %v96 = vrot.slane %v90, %v95
    %v101 = vunpack.c.l.b16 %v54
    %v102 = vunpack.c.l.b16 %v55
    %v103 = vunpack.c.l.b16 %v56
    %v104 = vunpack.c.l.b16 %v57
    %v105 = vpack.c.b16 %v102, %v101
    %v106 = vpack.c.b16 %v104, %v103
    %vm109 = vcmask 261120
    %v111 = vsel %vm109, %v46, 0
    %v114 = vsel %vm109, %v47, 0
    %v117 = vsel %vm109, %v48, 0
    %v120 = vsel %vm109, %v49, 0
    %v123 = vsel %vm109, %v50, 0
    %v126 = vsel %vm109, %v51, 0
    %v129 = vsel %vm109, %v52, 0
    %v132 = vsel %vm109, %v53, 0
    %134 = vmatprep.subr.bf16.mxu0 0
    %135 = vmatpush1.bf16.msra.mxu0 %v105
    %136 = vmatprep.subr.bf16.mxu0 0
    %137 = vmatpush1.bf16.msra.mxu0 %v106
    %138 = vmatprep.subr.bf16.mxu0 0
    %139 = vmatpush1.bf16.msra.mxu0 0
    %140 = vmatprep.subr.bf16.mxu0 0
    %141 = vmatpush1.bf16.msra.mxu0 0
    %142 = vmatprep.subr.bf16.mxu0 0
    %143 = vmatpush1.bf16.msra.mxu0 0
    %144 = vmatprep.subr.bf16.mxu0 0
    %145 = vmatpush1.bf16.msra.mxu0 0
    %146 = vmatprep.subr.bf16.mxu0 0
    %147 = vmatpush1.bf16.msra.mxu0 0
    %148 = vmatprep.subr.bf16.mxu0 0
    %149 = vmatpush1.bf16.msra.mxu0 0
    %150 = vmatprep.subr.bf16.mxu0 0
    %151 = vmatpush1.bf16.msra.mxu0 0
    %152 = vmatprep.subr.bf16.mxu0 0
    %153 = vmatpush1.bf16.msra.mxu0 0
    %154 = vmatprep.subr.bf16.mxu0 0
    %155 = vmatpush1.bf16.msra.mxu0 0
    %156 = vmatprep.subr.bf16.mxu0 0
    %157 = vmatpush1.bf16.msra.mxu0 0
    %158 = vmatprep.subr.bf16.mxu0 0
    %159 = vmatpush1.bf16.msra.mxu0 0
    %160 = vmatprep.subr.bf16.mxu0 0
    %161 = vmatpush1.bf16.msra.mxu0 0
    %162 = vmatprep.subr.bf16.mxu0 0
    %163 = vmatpush1.bf16.msra.mxu0 0
    %164 = vmatprep.subr.bf16.mxu0 0
    %165 = vmatpush1.bf16.msra.mxu0 0
    %166 = vmatprep.mubr.bf16.mxu0 0
    %167 = vmatmul.mubr.bf16.gmra.mrb[0].mxu0 %v111
    %v168 = vpop.f32.mrb[0].mxu0
    %v169 = vadd.f32 %v96, %v168
    %v170 = vpop.f32.mrb[0].mxu0
    %v171 = vpop.f32.mrb[0].mxu0
    %v172 = vadd.f32 %v96, %v171
    %v173 = vpop.f32.mrb[0].mxu0
    %174 = vmatprep.mubr.bf16.mxu0 0
    %175 = vmatmul.mubr.bf16.gmra.mrb[0].mxu0 %v114
    %v176 = vpop.f32.mrb[0].mxu0
    %v177 = vadd.f32 %v96, %v176
    %v178 = vpop.f32.mrb[0].mxu0
    %v179 = vpop.f32.mrb[0].mxu0
    %v180 = vadd.f32 %v96, %v179
    %v181 = vpop.f32.mrb[0].mxu0
    %182 = vmatprep.mubr.bf16.mxu0 0
    %183 = vmatmul.mubr.bf16.gmra.mrb[0].mxu0 %v117
    %v184 = vpop.f32.mrb[0].mxu0
    %v185 = vadd.f32 %v96, %v184
    %v186 = vpop.f32.mrb[0].mxu0
    %v187 = vpop.f32.mrb[0].mxu0
    %v188 = vadd.f32 %v96, %v187
    %v189 = vpop.f32.mrb[0].mxu0
    %190 = vmatprep.mubr.bf16.mxu0 0
    %191 = vmatmul.mubr.bf16.gmra.mrb[0].mxu0 %v120
    %v192 = vpop.f32.mrb[0].mxu0
    %v193 = vadd.f32 %v96, %v192
    %v194 = vpop.f32.mrb[0].mxu0
    %v195 = vpop.f32.mrb[0].mxu0
    %v196 = vadd.f32 %v96, %v195
    %v197 = vpop.f32.mrb[0].mxu0
    %198 = vmatprep.mubr.bf16.mxu0 0
    %199 = vmatmul.mubr.bf16.gmra.mrb[0].mxu0 %v123
    %v200 = vpop.f32.mrb[0].mxu0
    %v201 = vadd.f32 %v96, %v200
    %v202 = vpop.f32.mrb[0].mxu0
    %v203 = vpop.f32.mrb[0].mxu0
    %v204 = vadd.f32 %v96, %v203
    %v205 = vpop.f32.mrb[0].mxu0
    %206 = vmatprep.mubr.bf16.mxu0 0
    %207 = vmatmul.mubr.bf16.gmra.mrb[0].mxu0 %v126
    %v208 = vpop.f32.mrb[0].mxu0
    %v209 = vadd.f32 %v96, %v208
    %v210 = vpop.f32.mrb[0].mxu0
    %v211 = vpop.f32.mrb[0].mxu0
    %v212 = vadd.f32 %v96, %v211
    %v213 = vpop.f32.mrb[0].mxu0
    %214 = vmatprep.mubr.bf16.mxu0 0
    %215 = vmatmul.mubr.bf16.gmra.mrb[0].mxu0 %v129
    %v216 = vpop.f32.mrb[0].mxu0
    %v217 = vadd.f32 %v96, %v216
    %v218 = vpop.f32.mrb[0].mxu0
    %v219 = vpop.f32.mrb[0].mxu0
    %v220 = vadd.f32 %v96, %v219
    %v221 = vpop.f32.mrb[0].mxu0
    %222 = vmatprep.mubr.bf16.mxu0 0
    %223 = vmatmul.mubr.bf16.gmra.mrb[0].mxu0 %v132
    %v224 = vpop.f32.mrb[0].mxu0
    %v225 = vadd.f32 %v96, %v224
    %v226 = vpop.f32.mrb[0].mxu0
    %v227 = vpop.f32.mrb[0].mxu0
    %v228 = vadd.f32 %v96, %v227
    %v229 = vpop.f32.mrb[0].mxu0
    %230 = vdwg.mxu0
    %v231 = vmax.f32 %v169, 0.0
    %v232 = vmax.f32 %v172, 0.0
    %v233 = vmax.f32 %v177, 0.0
    %v234 = vmax.f32 %v180, 0.0
    %v235 = vmax.f32 %v185, 0.0
    %v236 = vmax.f32 %v188, 0.0
    %v237 = vmax.f32 %v193, 0.0
    %v238 = vmax.f32 %v196, 0.0
    %v239 = vmax.f32 %v201, 0.0
    %v240 = vmax.f32 %v204, 0.0
    %v241 = vmax.f32 %v209, 0.0
    %v242 = vmax.f32 %v212, 0.0
    %v243 = vmax.f32 %v217, 0.0
    %v244 = vmax.f32 %v220, 0.0
    %v245 = vmax.f32 %v225, 0.0
    %v246 = vmax.f32 %v228, 0.0
    %v247 = vpack.c.bf16 %v232, %v231
    %v248 = vpack.c.bf16 %v234, %v233
    %v249 = vpack.c.bf16 %v236, %v235
    %v250 = vpack.c.bf16 %v238, %v237
    %v251 = vpack.c.bf16 %v240, %v239
    %v252 = vpack.c.bf16 %v242, %v241
    %v253 = vpack.c.bf16 %v244, %v243
    %v254 = vpack.c.bf16 %v246, %v245
    %v255 = vlaneseq
    %v256 = vshrl.u32 %v255, 7
    %v257 = vsub.s32 0, %v256
    %v258 = vrot.slane %v91, %v257
    %v275 = vunpack.c.l.b16 %v58
    %v276 = vunpack.c.l.b16 %v59
    %v277 = vunpack.c.l.b16 %v60
    %v278 = vunpack.c.l.b16 %v61
    %v279 = vunpack.c.l.b16 %v62
    %v280 = vunpack.c.l.b16 %v63
    %v281 = vunpack.c.l.b16 %v64
    %v282 = vunpack.c.l.b16 %v65
    %v283 = vunpack.c.l.b16 %v66
    %v284 = vunpack.c.l.b16 %v67
    %v285 = vunpack.c.l.b16 %v68
    %v286 = vunpack.c.l.b16 %v69
    %v287 = vunpack.c.l.b16 %v70
    %v288 = vunpack.c.l.b16 %v71
    %v289 = vunpack.c.l.b16 %v72
    %v290 = vunpack.c.l.b16 %v73
    %v291 = vpack.c.b16 %v276, %v275
    %v292 = vpack.c.b16 %v278, %v277
    %v293 = vpack.c.b16 %v280, %v279
    %v294 = vpack.c.b16 %v282, %v281
    %v295 = vpack.c.b16 %v284, %v283
    %v296 = vpack.c.b16 %v286, %v285
    %v297 = vpack.c.b16 %v288, %v287
    %v298 = vpack.c.b16 %v290, %v289
    %307 = vmatprep.subr.bf16.mxu0 0
    %308 = vmatpush1.bf16.msra.mxu0 %v291
    %309 = vmatprep.subr.bf16.mxu0 0
    %310 = vmatpush1.bf16.msra.mxu0 %v292
    %311 = vmatprep.subr.bf16.mxu0 0
    %312 = vmatpush1.bf16.msra.mxu0 %v293
    %313 = vmatprep.subr.bf16.mxu0 0
    %314 = vmatpush1.bf16.msra.mxu0 %v294
    %315 = vmatprep.subr.bf16.mxu0 0
    %316 = vmatpush1.bf16.msra.mxu0 %v295
    %317 = vmatprep.subr.bf16.mxu0 0
    %318 = vmatpush1.bf16.msra.mxu0 %v296
    %319 = vmatprep.subr.bf16.mxu0 0
    %320 = vmatpush1.bf16.msra.mxu0 %v297
    %321 = vmatprep.subr.bf16.mxu0 0
    %322 = vmatpush1.bf16.msra.mxu0 %v298
    %323 = vmatprep.subr.bf16.mxu0 0
    %324 = vmatpush1.bf16.msra.mxu0 0
    %325 = vmatprep.subr.bf16.mxu0 0
    %326 = vmatpush1.bf16.msra.mxu0 0
    %327 = vmatprep.subr.bf16.mxu0 0
    %328 = vmatpush1.bf16.msra.mxu0 0
    %329 = vmatprep.subr.bf16.mxu0 0
    %330 = vmatpush1.bf16.msra.mxu0 0
    %331 = vmatprep.subr.bf16.mxu0 0
    %332 = vmatpush1.bf16.msra.mxu0 0
    %333 = vmatprep.subr.bf16.mxu0 0
    %334 = vmatpush1.bf16.msra.mxu0 0
    %335 = vmatprep.subr.bf16.mxu0 0
    %336 = vmatpush1.bf16.msra.mxu0 0
    %337 = vmatprep.subr.bf16.mxu0 0
    %338 = vmatpush1.bf16.msra.mxu0 0
    %339 = vmatprep.mubr.bf16.mxu0 0
    %340 = vmatmul.mubr.bf16.gmra.mrb[0].mxu0 %v247
    %v341 = vpop.f32.mrb[0].mxu0
    %v342 = vadd.f32 %v258, %v341
    %v343 = vpop.f32.mrb[0].mxu0
    %v344 = vpop.f32.mrb[0].mxu0
    %v345 = vadd.f32 %v258, %v344
    %v346 = vpop.f32.mrb[0].mxu0
    %347 = vmatprep.mubr.bf16.mxu0 0
    %348 = vmatmul.mubr.bf16.gmra.mrb[0].mxu0 %v248
    %v349 = vpop.f32.mrb[0].mxu0
    %v350 = vadd.f32 %v258, %v349
    %v351 = vpop.f32.mrb[0].mxu0
    %v352 = vpop.f32.mrb[0].mxu0
    %v353 = vadd.f32 %v258, %v352
    %v354 = vpop.f32.mrb[0].mxu0
    %355 = vmatprep.mubr.bf16.mxu0 0
    %356 = vmatmul.mubr.bf16.gmra.mrb[0].mxu0 %v249
    %v357 = vpop.f32.mrb[0].mxu0
    %v358 = vadd.f32 %v258, %v357
    %v359 = vpop.f32.mrb[0].mxu0
    %v360 = vpop.f32.mrb[0].mxu0
    %v361 = vadd.f32 %v258, %v360
    %v362 = vpop.f32.mrb[0].mxu0
    %363 = vmatprep.mubr.bf16.mxu0 0
    %364 = vmatmul.mubr.bf16.gmra.mrb[0].mxu0 %v250
    %v365 = vpop.f32.mrb[0].mxu0
    %v366 = vadd.f32 %v258, %v365
    %v367 = vpop.f32.mrb[0].mxu0
    %v368 = vpop.f32.mrb[0].mxu0
    %v369 = vadd.f32 %v258, %v368
    %v370 = vpop.f32.mrb[0].mxu0
    %371 = vmatprep.mubr.bf16.mxu0 0
    %372 = vmatmul.mubr.bf16.gmra.mrb[0].mxu0 %v251
    %v373 = vpop.f32.mrb[0].mxu0
    %v374 = vadd.f32 %v258, %v373
    %v375 = vpop.f32.mrb[0].mxu0
    %v376 = vpop.f32.mrb[0].mxu0
    %v377 = vadd.f32 %v258, %v376
    %v378 = vpop.f32.mrb[0].mxu0
    %379 = vmatprep.mubr.bf16.mxu0 0
    %380 = vmatmul.mubr.bf16.gmra.mrb[0].mxu0 %v252
    %v381 = vpop.f32.mrb[0].mxu0
    %v382 = vadd.f32 %v258, %v381
    %v383 = vpop.f32.mrb[0].mxu0
    %v384 = vpop.f32.mrb[0].mxu0
    %v385 = vadd.f32 %v258, %v384
    %v386 = vpop.f32.mrb[0].mxu0
    %387 = vmatprep.mubr.bf16.mxu0 0
    %388 = vmatmul.mubr.bf16.gmra.mrb[0].mxu0 %v253
    %v389 = vpop.f32.mrb[0].mxu0
    %v390 = vadd.f32 %v258, %v389
    %v391 = vpop.f32.mrb[0].mxu0
    %v392 = vpop.f32.mrb[0].mxu0
    %v393 = vadd.f32 %v258, %v392
    %v394 = vpop.f32.mrb[0].mxu0
    %395 = vmatprep.mubr.bf16.mxu0 0
    %396 = vmatmul.mubr.bf16.gmra.mrb[0].mxu0 %v254
    %v397 = vpop.f32.mrb[0].mxu0
    %v398 = vadd.f32 %v258, %v397
    %v399 = vpop.f32.mrb[0].mxu0
    %v400 = vpop.f32.mrb[0].mxu0
    %v401 = vadd.f32 %v258, %v400
    %v402 = vpop.f32.mrb[0].mxu0
    %403 = vdwg.mxu0
    %v404 = vmax.f32 %v342, 0.0
    %v405 = vmax.f32 %v345, 0.0
    %v406 = vmax.f32 %v350, 0.0
    %v407 = vmax.f32 %v353, 0.0
    %v408 = vmax.f32 %v358, 0.0
    %v409 = vmax.f32 %v361, 0.0
    %v410 = vmax.f32 %v366, 0.0
    %v411 = vmax.f32 %v369, 0.0
    %v412 = vmax.f32 %v374, 0.0
    %v413 = vmax.f32 %v377, 0.0
    %v414 = vmax.f32 %v382, 0.0
    %v415 = vmax.f32 %v385, 0.0
    %v416 = vmax.f32 %v390, 0.0
    %v417 = vmax.f32 %v393, 0.0
    %v418 = vmax.f32 %v398, 0.0
    %v419 = vmax.f32 %v401, 0.0
    %v420 = vpack.c.bf16 %v405, %v404
    %v421 = vpack.c.bf16 %v407, %v406
    %v422 = vpack.c.bf16 %v409, %v408
    %v423 = vpack.c.bf16 %v411, %v410
    %v424 = vpack.c.bf16 %v413, %v412
    %v425 = vpack.c.bf16 %v415, %v414
    %v426 = vpack.c.bf16 %v417, %v416
    %v427 = vpack.c.bf16 %v419, %v418
    %v428 = vlaneseq
    %v429 = vshrl.u32 %v428, 7
    %v430 = vsub.s32 0, %v429
    %v431 = vrot.slane %v92, %v430
    %v448 = vunpack.c.l.b16 %v74
    %v449 = vunpack.c.l.b16 %v75
    %v450 = vunpack.c.l.b16 %v76
    %v451 = vunpack.c.l.b16 %v77
    %v452 = vunpack.c.l.b16 %v78
    %v453 = vunpack.c.l.b16 %v79
    %v454 = vunpack.c.l.b16 %v80
    %v455 = vunpack.c.l.b16 %v81
    %v456 = vunpack.c.l.b16 %v82
    %v457 = vunpack.c.l.b16 %v83
    %v458 = vunpack.c.l.b16 %v84
    %v459 = vunpack.c.l.b16 %v85
    %v460 = vunpack.c.l.b16 %v86
    %v461 = vunpack.c.l.b16 %v87
    %v462 = vunpack.c.l.b16 %v88
    %v463 = vunpack.c.l.b16 %v89
    %v464 = vpack.c.b16 %v449, %v448
    %v465 = vpack.c.b16 %v451, %v450
    %v466 = vpack.c.b16 %v453, %v452
    %v467 = vpack.c.b16 %v455, %v454
    %v468 = vpack.c.b16 %v457, %v456
    %v469 = vpack.c.b16 %v459, %v458
    %v470 = vpack.c.b16 %v461, %v460
    %v471 = vpack.c.b16 %v463, %v462
    %480 = vmatprep.subr.bf16.mxu0 0
    %481 = vmatpush1.bf16.msra.mxu0 %v464
    %482 = vmatprep.subr.bf16.mxu0 0
    %483 = vmatpush1.bf16.msra.mxu0 %v465
    %484 = vmatprep.subr.bf16.mxu0 0
    %485 = vmatpush1.bf16.msra.mxu0 %v466
    %486 = vmatprep.subr.bf16.mxu0 0
    %487 = vmatpush1.bf16.msra.mxu0 %v467
    %488 = vmatprep.subr.bf16.mxu0 0
    %489 = vmatpush1.bf16.msra.mxu0 %v468
    %490 = vmatprep.subr.bf16.mxu0 0
    %491 = vmatpush1.bf16.msra.mxu0 %v469
    %492 = vmatprep.subr.bf16.mxu0 0
    %493 = vmatpush1.bf16.msra.mxu0 %v470
    %494 = vmatprep.subr.bf16.mxu0 0
    %495 = vmatpush1.bf16.msra.mxu0 %v471
    %496 = vmatprep.subr.bf16.mxu0 0
    %497 = vmatpush1.bf16.msra.mxu0 0
    %498 = vmatprep.subr.bf16.mxu0 0
    %499 = vmatpush1.bf16.msra.mxu0 0
    %500 = vmatprep.subr.bf16.mxu0 0
    %501 = vmatpush1.bf16.msra.mxu0 0
    %502 = vmatprep.subr.bf16.mxu0 0
    %503 = vmatpush1.bf16.msra.mxu0 0
    %504 = vmatprep.subr.bf16.mxu0 0
    %505 = vmatpush1.bf16.msra.mxu0 0
    %506 = vmatprep.subr.bf16.mxu0 0
    %507 = vmatpush1.bf16.msra.mxu0 0
    %508 = vmatprep.subr.bf16.mxu0 0
    %509 = vmatpush1.bf16.msra.mxu0 0
    %510 = vmatprep.subr.bf16.mxu0 0
    %511 = vmatpush1.bf16.msra.mxu0 0
    %512 = vmatprep.mubr.bf16.mxu0 0
    %513 = vmatmul.mubr.bf16.gmra.mrb[0].mxu0 %v420
    %v514 = vpop.f32.mrb[0].mxu0
    %v515 = vadd.f32 %v431, %v514
    %v516 = vpop.f32.mrb[0].mxu0
    %v517 = vpop.f32.mrb[0].mxu0
    %v518 = vadd.f32 %v431, %v517
    %v519 = vpop.f32.mrb[0].mxu0
    %520 = vmatprep.mubr.bf16.mxu0 0
    %521 = vmatmul.mubr.bf16.gmra.mrb[0].mxu0 %v421
    %v522 = vpop.f32.mrb[0].mxu0
    %v523 = vadd.f32 %v431, %v522
    %v524 = vpop.f32.mrb[0].mxu0
    %v525 = vpop.f32.mrb[0].mxu0
    %v526 = vadd.f32 %v431, %v525
    %v527 = vpop.f32.mrb[0].mxu0
    %528 = vmatprep.mubr.bf16.mxu0 0
    %529 = vmatmul.mubr.bf16.gmra.mrb[0].mxu0 %v422
    %v530 = vpop.f32.mrb[0].mxu0
    %v531 = vadd.f32 %v431, %v530
    %v532 = vpop.f32.mrb[0].mxu0
    %v533 = vpop.f32.mrb[0].mxu0
    %v534 = vadd.f32 %v431, %v533
    %v535 = vpop.f32.mrb[0].mxu0
    %536 = vmatprep.mubr.bf16.mxu0 0
    %537 = vmatmul.mubr.bf16.gmra.mrb[0].mxu0 %v423
    %v538 = vpop.f32.mrb[0].mxu0
    %v539 = vadd.f32 %v431, %v538
    %v540 = vpop.f32.mrb[0].mxu0
    %v541 = vpop.f32.mrb[0].mxu0
    %v542 = vadd.f32 %v431, %v541
    %v543 = vpop.f32.mrb[0].mxu0
    %544 = vmatprep.mubr.bf16.mxu0 0
    %545 = vmatmul.mubr.bf16.gmra.mrb[0].mxu0 %v424
    %v546 = vpop.f32.mrb[0].mxu0
    %v547 = vadd.f32 %v431, %v546
    %v548 = vpop.f32.mrb[0].mxu0
    %v549 = vpop.f32.mrb[0].mxu0
    %v550 = vadd.f32 %v431, %v549
    %v551 = vpop.f32.mrb[0].mxu0
    %552 = vmatprep.mubr.bf16.mxu0 0
    %553 = vmatmul.mubr.bf16.gmra.mrb[0].mxu0 %v425
    %v554 = vpop.f32.mrb[0].mxu0
    %v555 = vadd.f32 %v431, %v554
    %v556 = vpop.f32.mrb[0].mxu0
    %v557 = vpop.f32.mrb[0].mxu0
    %v558 = vadd.f32 %v431, %v557
    %v559 = vpop.f32.mrb[0].mxu0
    %560 = vmatprep.mubr.bf16.mxu0 0
    %561 = vmatmul.mubr.bf16.gmra.mrb[0].mxu0 %v426
    %v562 = vpop.f32.mrb[0].mxu0
    %v563 = vadd.f32 %v431, %v562
    %v564 = vpop.f32.mrb[0].mxu0
    %v565 = vpop.f32.mrb[0].mxu0
    %v566 = vadd.f32 %v431, %v565
    %v567 = vpop.f32.mrb[0].mxu0
    %568 = vmatprep.mubr.bf16.mxu0 0
    %569 = vmatmul.mubr.bf16.gmra.mrb[0].mxu0 %v427
    %v570 = vpop.f32.mrb[0].mxu0
    %v571 = vadd.f32 %v431, %v570
    %v572 = vpop.f32.mrb[0].mxu0
    %v573 = vpop.f32.mrb[0].mxu0
    %v574 = vadd.f32 %v431, %v573
    %v575 = vpop.f32.mrb[0].mxu0
    %576 = vdwg.mxu0
    %577 = vxpose.xlu0.b32.start [1/16] %v515, 128
    %578 = vxpose.xlu0.b32.cont [2/16] %v518, 128
    %579 = vxpose.xlu0.b32.cont [3/16] %v523, 128
    %580 = vxpose.xlu0.b32.cont [4/16] %v526, 128
    %581 = vxpose.xlu0.b32.cont [5/16] %v531, 128
    %582 = vxpose.xlu0.b32.cont [6/16] %v534, 128
    %583 = vxpose.xlu0.b32.cont [7/16] %v539, 128
    %584 = vxpose.xlu0.b32.cont [8/16] %v542, 128
    %585 = vxpose.xlu0.b32.cont [9/16] %v547, 128
    %586 = vxpose.xlu0.b32.cont [10/16] %v550, 128
    %587 = vxpose.xlu0.b32.cont [11/16] %v555, 128
    %588 = vxpose.xlu0.b32.cont [12/16] %v558, 128
    %589 = vxpose.xlu0.b32.cont [13/16] %v563, 128
    %590 = vxpose.xlu0.b32.cont [14/16] %v566, 128
    %591 = vxpose.xlu0.b32.cont [15/16] %v571, 128
    %592 = vxpose.xlu0.b32.end [16/16] %v574, 128
    %v593 = vpop.trf.xlu0
    %v594 = vpop.trf.xlu0
    %v595 = vpop.trf.xlu0
    %v596 = vpop.trf.xlu0
    %v597 = vpop.trf.xlu0
    %v598 = vpop.trf.xlu0
    %v599 = vpop.trf.xlu0
    %v600 = vpop.trf.xlu0
    %v601 = vpop.trf.xlu0
    %v602 = vpop.trf.xlu0
    %v603 = vpop.trf.xlu0
    %v604 = vpop.trf.xlu0
    %v605 = vpop.trf.xlu0
    %v606 = vpop.trf.xlu0
    %v607 = vpop.trf.xlu0
    %v608 = vpop.trf.xlu0
    %v609 = vtanh.pop %v593
    %610 = vst [vmem:[#allocation5] sm:$0x3] %v609
    // Predicated region
    $region18: #{tpu_custom_call.1} parent=1 // pred_check
      _
    $region19: #{tpu_custom_call.1} parent=1 // pred_check_branch
      %612 = sbr.rel (0) target = $region21
    $region20: #{tpu_custom_call.1} parent=1 // pred_region
      %s614 = ssub.s32 32, 32
      %615 = vsyncadd [#allocation4], %s614
      %s617 = sshll.u32 [#allocation5], 4
      %s618 = int_to_ptr.vmem [resolvable:$true] %s617
      %620 = dma.vmem_to_hbm [thread:$0]  %s618, 32, %s3, [#allocation4]
    $region21: #{tpu_custom_call.1} parent=1 // pred_fallthru
      _
    // Predicated region
    $region22: #{tpu_custom_call.1} parent=1 // pred_check
      _
    $region23: #{tpu_custom_call.1} parent=1 // pred_check_branch
      %622 = sbr.rel (0) target = $region25
    $region24: #{tpu_custom_call.1} parent=1 // pred_region
      %623 = dma.done [#allocation4], 32
    $region25: #{tpu_custom_call.1} parent=1 // pred_fallthru
      _
    %624 = vsyncpa [#allocation3], 1
    %625 = vsyncpa [#allocation4], 1

</llo_original>
